<compile_context>
chip_gen: v5e
topology: v5e:2x2
jax: 0.10.0
libtpu: 0.0.40
codegen_flags: <defaults>
</compile_context>

<pallas_src>
import functools

import jax
import jax.numpy as jnp
from jax.experimental import pallas as pl
from jax.experimental.pallas import tpu as pltpu


def dqn_kernel(x_ref, w1_ref, b1_ref, w2_ref, b2_ref, out_ref):
    # fc1: (TB, S) @ (S, H) on the MXU, bf16 operands, f32 accumulation.
    h = jnp.dot(x_ref[...], w1_ref[...], preferred_element_type=jnp.float32)
    # bias + ReLU epilogue in f32 on the VPU.
    h = jnp.maximum(h + b1_ref[...], 0.0)
    # fc2: (TB, H) @ (H, A) on the MXU, bf16 operands, f32 accumulation.
    y = jnp.dot(h.astype(jnp.bfloat16), w2_ref[...],
                preferred_element_type=jnp.float32)
    out_ref[...] = (y + b2_ref[...]).astype(out_ref.dtype)


def _round_up(n, m):
    return ((n + m - 1) // m) * m


def _detect_num_tensorcores():
    """Best-effort TensorCore count reachable by one pallas_call via
    dimension_semantics='parallel' (v7x megacore = 2). Defaults to 1."""
    try:
        dev = jax.devices()[0]
    except Exception:
        return 1
    for attr in ("num_cores", "core_count"):
        v = getattr(dev, attr, None)
        if isinstance(v, int) and v > 0:
            return v
    return 1


def _pick_batch_tile(batch, num_cores, max_tb=8192):
    """One batch tile per TensorCore; 16-row granularity (bf16 sublane pack);
    capped so double-buffered (x + out) blocks stay a few MB of VMEM even on
    v7x's smaller 64 MiB / 32 MiB-scoped VMEM."""
    b_grain = _round_up(batch, 16)
    tb = _round_up(pl.cdiv(b_grain, num_cores), 16)
    return min(tb, max_tb)


def prepare_params(w1, b1, w2, b2):
    """One-time parameter prep, hoisted out of the per-step forward:
    weights -> bf16 for the MXU path; biases stay f32 with shape (1, N).
    Weights are stored [in_features, out_features] so the kernel computes
    y = relu(x @ W1 + b1) @ W2 + b2 directly."""
    return (jnp.asarray(w1, jnp.bfloat16),
            jnp.asarray(b1, jnp.float32).reshape(1, -1),
            jnp.asarray(w2, jnp.bfloat16),
            jnp.asarray(b2, jnp.float32).reshape(1, -1))


@functools.partial(jax.jit, static_argnames=("tb",))
def _dqn_forward_impl(x, w1_b, b1, w2_b, b2, *, tb):
    B, S = x.shape
    H = w1_b.shape[1]
    A = w2_b.shape[1]
    B_pad = _round_up(B, tb)

    # bf16 activations; zero-pad batch rows up to the tile multiple (padded
    # rows produce garbage that is sliced off below).
    x_b = x.astype(jnp.bfloat16)
    if B_pad != B:
        x_b = jnp.pad(x_b, ((0, B_pad - B), (0, 0)))

    grid = (B_pad // tb,)

    out_padded = pl.pallas_call(
        dqn_kernel,
        out_shape=jax.ShapeDtypeStruct((B_pad, A), jnp.float32),
        grid_spec=pltpu.PrefetchScalarGridSpec(
            num_scalar_prefetch=0,
            grid=grid,
            in_specs=[
                # Activations stream per batch tile.
                pl.BlockSpec((tb, S), lambda i: (i, 0)),
                # Weights / biases: constant index_map -> VMEM-resident,
                # never re-fetched across grid steps.
                pl.BlockSpec((S, H), lambda i: (0, 0)),
                pl.BlockSpec((1, H), lambda i: (0, 0)),
                pl.BlockSpec((H, A), lambda i: (0, 0)),
                pl.BlockSpec((1, A), lambda i: (0, 0)),
            ],
            out_specs=pl.BlockSpec((tb, A), lambda i: (i, 0)),
        ),
        compiler_params=pltpu.CompilerParams(
            # Batch tiles are independent -> megacore-shardable on v7x;
            # near-zero effect (harmless) on single-TC v5e/v6e.
            dimension_semantics=("parallel",)),
    )(x_b, w1_b, b1, w2_b, b2)

    return out_padded if B_pad == B else out_padded[:B]


_NUM_CORES = None


def dqn_forward(x, params, *, num_cores=None):
    """x: (B, S) f32; params from prepare_params() -> (B, A) f32."""
    global _NUM_CORES
    if num_cores is None:
        if _NUM_CORES is None:
            _NUM_CORES = _detect_num_tensorcores()
        num_cores = _NUM_CORES
    tb = _pick_batch_tile(x.shape[0], num_cores)
    w1_b, b1, w2_b, b2 = params
    return _dqn_forward_impl(x, w1_b, b1, w2_b, b2, tb=tb)


def init_linear(key, in_dim, out_dim):
    """Deterministic init mimicking torch.nn.Linear (uniform +/- 1/sqrt(in))."""
    k_w, k_b = jax.random.split(key)
    bound = 1.0 / jnp.sqrt(jnp.float32(in_dim))
    # Stored as [in, out] so the kernel does x @ W.
    w = jax.random.uniform(k_w, (in_dim, out_dim), jnp.float32, -bound, bound)
    b = jax.random.uniform(k_b, (1, out_dim), jnp.float32, -bound, bound)
    return w, b


if __name__ == "__main__":
    # DQN(state_dim=16, action_dim=8, hidden_dim=256) on a training-sized
    # batch of 256 transitions.
    batch = 256
    state_dim = 16
    action_dim = 8
    hidden_dim = 256

    key = jax.random.PRNGKey(0)
    k_x, k_fc1, k_fc2 = jax.random.split(key, 3)

    x = jax.random.normal(k_x, (batch, state_dim), jnp.float32)
    w1, b1 = init_linear(k_fc1, state_dim, hidden_dim)
    w2, b2 = init_linear(k_fc2, hidden_dim, action_dim)

    # One-time (init-time) weight cast; forward path reuses these every step.
    params = prepare_params(w1, b1, w2, b2)

    out = dqn_forward(x, params)
    out = jax.block_until_ready(out)
    assert out.shape == (batch, action_dim)

    # Reference with the same bf16-operand / f32-accumulate math (tight check).
    h_ref = jnp.maximum(
        jnp.dot(x.astype(jnp.bfloat16), w1.astype(jnp.bfloat16),
                preferred_element_type=jnp.float32) + b1, 0.0)
    ref_bf16 = jnp.dot(h_ref.astype(jnp.bfloat16), w2.astype(jnp.bfloat16),
                       preferred_element_type=jnp.float32) + b2
    assert jnp.allclose(out, ref_bf16, atol=1e-4, rtol=1e-4)

    # Sanity check against full-f32 math (loose, bounds the bf16 cast error).
    ref_f32 = jnp.maximum(x @ w1 + b1, 0.0) @ w2 + b2
    assert jnp.allclose(out, ref_f32, atol=5e-2, rtol=5e-2)

    print("KERNEL_OK")
</pallas_src>

<mosaic_0001>
module attributes {stable_mosaic.version = 11 : i64} {
  func.func @dqn_kernel(%arg0: i32, %arg1: memref<256x16xbf16, #tpu.memory_space<vmem>>, %arg2: memref<16x256xbf16, #tpu.memory_space<vmem>>, %arg3: memref<1x256xf32, #tpu.memory_space<vmem>>, %arg4: memref<256x8xbf16, #tpu.memory_space<vmem>>, %arg5: memref<1x8xf32, #tpu.memory_space<vmem>>, %arg6: memref<256x8xf32, #tpu.memory_space<vmem>>) attributes {dimension_semantics = [#tpu.dimension_semantics<parallel>], iteration_bounds = array<i64: 1>, scalar_prefetch = 0 : i64, scratch_operands = 0 : i64, tpu.core_type = #tpu.core_type<tc>, window_params = [{transform_indices = @transform_0, window_bounds = array<i64: 256, 16>}, {pipeline_mode = #tpu.pipeline_mode<synchronous>, transform_indices = @transform_1, window_bounds = array<i64: 16, 256>}, {pipeline_mode = #tpu.pipeline_mode<synchronous>, transform_indices = @transform_2, window_bounds = array<i64: 1, 256>}, {pipeline_mode = #tpu.pipeline_mode<synchronous>, transform_indices = @transform_3, window_bounds = array<i64: 256, 8>}, {pipeline_mode = #tpu.pipeline_mode<synchronous>, transform_indices = @transform_4, window_bounds = array<i64: 1, 8>}, {transform_indices = @transform_5, window_bounds = array<i64: 256, 8>}]} {
    %c0 = arith.constant 0 : index
    %c0_0 = arith.constant 0 : index
    %0 = vector.load %arg1[%c0, %c0_0] : memref<256x16xbf16, #tpu.memory_space<vmem>>, vector<256x16xbf16>
    %c0_1 = arith.constant 0 : index
    %c0_2 = arith.constant 0 : index
    %1 = vector.load %arg2[%c0_1, %c0_2] : memref<16x256xbf16, #tpu.memory_space<vmem>>, vector<16x256xbf16>
    %cst = arith.constant dense<0.000000e+00> : vector<256x256xf32>
    %2 = tpu.matmul %0, %1, %cst {dimension_numbers = #tpu.dot_dimension_numbers<[1], [0], [0], [1], [0, 0, 1, 1], [], []>} : vector<256x16xbf16>, vector<16x256xbf16>, vector<256x256xf32> -> vector<256x256xf32>
    %c0_3 = arith.constant 0 : index
    %c0_4 = arith.constant 0 : index
    %3 = vector.load %arg3[%c0_3, %c0_4] : memref<1x256xf32, #tpu.memory_space<vmem>>, vector<1x256xf32>
    %4 = vector.broadcast %3 : vector<1x256xf32> to vector<256x256xf32>
    %5 = arith.addf %2, %4 : vector<256x256xf32>
    %cst_5 = arith.constant 0.000000e+00 : f32
    %6 = vector.broadcast %cst_5 : f32 to vector<256x256xf32>
    %7 = arith.maximumf %5, %6 : vector<256x256xf32>
    %8 = arith.truncf %7 : vector<256x256xf32> to vector<256x256xbf16>
    %c0_6 = arith.constant 0 : index
    %c0_7 = arith.constant 0 : index
    %9 = vector.load %arg4[%c0_6, %c0_7] : memref<256x8xbf16, #tpu.memory_space<vmem>>, vector<256x8xbf16>
    %cst_8 = arith.constant dense<0.000000e+00> : vector<256x8xf32>
    %10 = tpu.matmul %8, %9, %cst_8 {dimension_numbers = #tpu.dot_dimension_numbers<[1], [0], [0], [1], [0, 0, 1, 1], [], []>} : vector<256x256xbf16>, vector<256x8xbf16>, vector<256x8xf32> -> vector<256x8xf32>
    %c0_9 = arith.constant 0 : index
    %c0_10 = arith.constant 0 : index
    %11 = vector.load %arg5[%c0_9, %c0_10] : memref<1x8xf32, #tpu.memory_space<vmem>>, vector<1x8xf32>
    %12 = vector.broadcast %11 : vector<1x8xf32> to vector<256x8xf32>
    %13 = arith.addf %10, %12 : vector<256x8xf32>
    %c0_11 = arith.constant 0 : index
    %c0_12 = arith.constant 0 : index
    %14 = vector.load %arg6[%c0_11, %c0_12] : memref<256x8xf32, #tpu.memory_space<vmem>>, vector<256x8xf32>
    tpu.vector_store %arg6[%c0_11, %c0_12], %13 {strides = array<i32>} : memref<256x8xf32, #tpu.memory_space<vmem>>, vector<256x8xf32>,
    return
  }
  func.func @transform_0(%arg0: i32) -> (i32, i32) {
    %c0_i32 = arith.constant 0 : i32
    %c0_i32_0 = arith.constant 0 : i32
    return %arg0, %c0_i32 : i32, i32
  }
  func.func @transform_1(%arg0: i32) -> (i32, i32) {
    %c0_i32 = arith.constant 0 : i32
    %c0_i32_0 = arith.constant 0 : i32
    %c0_i32_1 = arith.constant 0 : i32
    return %c0_i32, %c0_i32_0 : i32, i32
  }
  func.func @transform_2(%arg0: i32) -> (i32, i32) {
    %c0_i32 = arith.constant 0 : i32
    %c0_i32_0 = arith.constant 0 : i32
    %c0_i32_1 = arith.constant 0 : i32
    return %c0_i32, %c0_i32_0 : i32, i32
  }
  func.func @transform_3(%arg0: i32) -> (i32, i32) {
    %c0_i32 = arith.constant 0 : i32
    %c0_i32_0 = arith.constant 0 : i32
    %c0_i32_1 = arith.constant 0 : i32
    return %c0_i32, %c0_i32_0 : i32, i32
  }
  func.func @transform_4(%arg0: i32) -> (i32, i32) {
    %c0_i32 = arith.constant 0 : i32
    %c0_i32_0 = arith.constant 0 : i32
    %c0_i32_1 = arith.constant 0 : i32
    return %c0_i32, %c0_i32_0 : i32, i32
  }
  func.func @transform_5(%arg0: i32) -> (i32, i32) {
    %c0_i32 = arith.constant 0 : i32
    %c0_i32_0 = arith.constant 0 : i32
    return %arg0, %c0_i32 : i32, i32
  }
}

</mosaic_0001>

<llo_original>
// kernel: _dqn_forward_impl.1
$region0: #{_dqn_forward_impl.1}
  #allocation0 [shape = 'u32[]', space=smem, size = 0x4, offset = 0x4, fixed_abs, tag = 'smem constant byte address 0x4 - core index']
  #allocation1 [shape = 'u32[72,128]{1,0:T(1,128)}', space=vmem, size = 0x9000, scoped, tag = 'internal scratch']
  %s0 = inlined_call_operand.vmem [shape: bf16[256,16], index: 0, kind: input, shape index: {}]
  %s1 = inlined_call_operand.vmem [shape: bf16[16,256], index: 1, kind: input, shape index: {}]
  %s2 = inlined_call_operand.vmem [shape: f32[1,256], index: 2, kind: input, shape index: {}]
  %s3 = inlined_call_operand.vmem [shape: bf16[256,8], index: 3, kind: input, shape index: {}]
  %s4 = inlined_call_operand.vmem [shape: f32[1,8], index: 4, kind: input, shape index: {}]
  %s5 = inlined_call_operand.vmem [shape: f32[256,8], index: 5, kind: output, shape index: {}]
  %s6 = sld [smem:[#allocation0]]
  $region30: #{_dqn_forward_impl.1} parent=0
    _
  %s8 = ssub.s32 1, %s6
  %s9 = scalar_select 0, %s8, %s6
  // Predicated region
  $region2: #{_dqn_forward_impl.1} parent=0 // pred_check
    _
  $region3: #{_dqn_forward_impl.1} parent=0 // pred_check_branch
    %11 = sbr.rel (0) target = $region5
  $region4: #{_dqn_forward_impl.1} parent=0 // pred_region
    _
  $region5: #{_dqn_forward_impl.1} parent=0 // pred_fallthru
    _
  // Predicated region
  $region6: #{_dqn_forward_impl.1} parent=0 // pred_check
    _
  $region7: #{_dqn_forward_impl.1} parent=0 // pred_check_branch
    %13 = sbr.rel (0) target = $region9
  $region8: #{_dqn_forward_impl.1} parent=0 // pred_region
    _
  $region9: #{_dqn_forward_impl.1} parent=0 // pred_fallthru
    _
  // Predicated region
  $region10: #{_dqn_forward_impl.1} parent=0 // pred_check
    _
  $region11: #{_dqn_forward_impl.1} parent=0 // pred_check_branch
    %15 = sbr.rel (0) target = $region13
  $region12: #{_dqn_forward_impl.1} parent=0 // pred_region
    _
  $region13: #{_dqn_forward_impl.1} parent=0 // pred_fallthru
    _
  // Predicated region
  $region14: #{_dqn_forward_impl.1} parent=0 // pred_check
    _
  $region15: #{_dqn_forward_impl.1} parent=0 // pred_check_branch
    %17 = sbr.rel (0) target = $region17
  $region16: #{_dqn_forward_impl.1} parent=0 // pred_region
    _
  $region17: #{_dqn_forward_impl.1} parent=0 // pred_fallthru
    _
  // Predicated region
  $region18: #{_dqn_forward_impl.1} parent=0 // pred_check
    _
  $region19: #{_dqn_forward_impl.1} parent=0 // pred_check_branch
    %19 = sbr.rel (0) target = $region21
  $region20: #{_dqn_forward_impl.1} parent=0 // pred_region
    _
  $region21: #{_dqn_forward_impl.1} parent=0 // pred_fallthru
    _
  %v21 = vld [vmem:[%s0] sm:$0xf]
  %v22 = vld [vmem:[%s0 + $0x4] sm:$0xf]
  %v23 = vld [vmem:[%s0 + $0x8] sm:$0xf]
  %v24 = vld [vmem:[%s0 + $0xc] sm:$0xf]
  %v25 = vld [vmem:[%s0 + $0x10] sm:$0xf]
  %v26 = vld [vmem:[%s0 + $0x14] sm:$0xf]
  %v27 = vld [vmem:[%s0 + $0x18] sm:$0xf]
  %v28 = vld [vmem:[%s0 + $0x1c] sm:$0xf]
  %v29 = vld [vmem:[%s0 + $0x20] sm:$0xf]
  %v30 = vld [vmem:[%s0 + $0x24] sm:$0xf]
  %v31 = vld [vmem:[%s0 + $0x28] sm:$0xf]
  %v32 = vld [vmem:[%s0 + $0x2c] sm:$0xf]
  %v33 = vld [vmem:[%s0 + $0x30] sm:$0xf]
  %v34 = vld [vmem:[%s0 + $0x34] sm:$0xf]
  %v35 = vld [vmem:[%s0 + $0x38] sm:$0xf]
  %v36 = vld [vmem:[%s0 + $0x3c] sm:$0xf]
  %v37 = vld [vmem:[%s0 + $0x40] sm:$0xf]
  %v38 = vld [vmem:[%s0 + $0x44] sm:$0xf]
  %v39 = vld [vmem:[%s0 + $0x48] sm:$0xf]
  %v40 = vld [vmem:[%s0 + $0x4c] sm:$0xf]
  %v41 = vld [vmem:[%s0 + $0x50] sm:$0xf]
  %v42 = vld [vmem:[%s0 + $0x54] sm:$0xf]
  %v43 = vld [vmem:[%s0 + $0x58] sm:$0xf]
  %v44 = vld [vmem:[%s0 + $0x5c] sm:$0xf]
  %v45 = vld [vmem:[%s0 + $0x60] sm:$0xf]
  %v46 = vld [vmem:[%s0 + $0x64] sm:$0xf]
  %v47 = vld [vmem:[%s0 + $0x68] sm:$0xf]
  %v48 = vld [vmem:[%s0 + $0x6c] sm:$0xf]
  %v49 = vld [vmem:[%s0 + $0x70] sm:$0xf]
  %v50 = vld [vmem:[%s0 + $0x74] sm:$0xf]
  %v51 = vld [vmem:[%s0 + $0x78] sm:$0xf]
  %v52 = vld [vmem:[%s0 + $0x7c] sm:$0xf]
  %v53 = vld [vmem:[%s1] sm:$0xff]
  %v54 = vld [vmem:[%s1 + $0x8] sm:$0xff]
  %v55 = vld [vmem:[%s2] sm:$0x3]
  %v57 = vperm.slane %v55, 0
  %v58 = vperm.slane %v55, 1
  %v93 = vunpack.c.l.b16 %v21
  %v94 = vunpack.c.l.b16 %v22
  %v95 = vunpack.c.l.b16 %v23
  %v96 = vunpack.c.l.b16 %v24
  %v97 = vunpack.c.l.b16 %v25
  %v98 = vunpack.c.l.b16 %v26
  %v99 = vunpack.c.l.b16 %v27
  %v100 = vunpack.c.l.b16 %v28
  %v101 = vunpack.c.l.b16 %v29
  %v102 = vunpack.c.l.b16 %v30
  %v103 = vunpack.c.l.b16 %v31
  %v104 = vunpack.c.l.b16 %v32
  %v105 = vunpack.c.l.b16 %v33
  %v106 = vunpack.c.l.b16 %v34
  %v107 = vunpack.c.l.b16 %v35
  %v108 = vunpack.c.l.b16 %v36
  %v109 = vunpack.c.l.b16 %v37
  %v110 = vunpack.c.l.b16 %v38
  %v111 = vunpack.c.l.b16 %v39
  %v112 = vunpack.c.l.b16 %v40
  %v113 = vunpack.c.l.b16 %v41
  %v114 = vunpack.c.l.b16 %v42
  %v115 = vunpack.c.l.b16 %v43
  %v116 = vunpack.c.l.b16 %v44
  %v117 = vunpack.c.l.b16 %v45
  %v118 = vunpack.c.l.b16 %v46
  %v119 = vunpack.c.l.b16 %v47
  %v120 = vunpack.c.l.b16 %v48
  %v121 = vunpack.c.l.b16 %v49
  %v122 = vunpack.c.l.b16 %v50
  %v123 = vunpack.c.l.b16 %v51
  %v124 = vunpack.c.l.b16 %v52
  %v125 = vpack.c.b16 %v94, %v93
  %v126 = vpack.c.b16 %v96, %v95
  %v127 = vpack.c.b16 %v98, %v97
  %v128 = vpack.c.b16 %v100, %v99
  %v129 = vpack.c.b16 %v102, %v101
  %v130 = vpack.c.b16 %v104, %v103
  %v131 = vpack.c.b16 %v106, %v105
  %v132 = vpack.c.b16 %v108, %v107
  %v133 = vpack.c.b16 %v110, %v109
  %v134 = vpack.c.b16 %v112, %v111
  %v135 = vpack.c.b16 %v114, %v113
  %v136 = vpack.c.b16 %v116, %v115
  %v137 = vpack.c.b16 %v118, %v117
  %v138 = vpack.c.b16 %v120, %v119
  %v139 = vpack.c.b16 %v122, %v121
  %v140 = vpack.c.b16 %v124, %v123
  %v143 = vunpack.c.l.b16 %v53
  %v144 = vunpack.c.h.b16 %v53
  %v145 = vunpack.c.l.b16 %v54
  %v146 = vunpack.c.h.b16 %v54
  %v147 = vpack.c.b16 %v145, %v143
  %v148 = vpack.c.b16 %v146, %v144
  %vm151 = vcmask 130048
  %v153 = vsel %vm151, %v125, 0
  %v156 = vsel %vm151, %v126, 0
  %v159 = vsel %vm151, %v127, 0
  %v162 = vsel %vm151, %v128, 0
  %v165 = vsel %vm151, %v129, 0
  %v168 = vsel %vm151, %v130, 0
  %v171 = vsel %vm151, %v131, 0
  %v174 = vsel %vm151, %v132, 0
  %v177 = vsel %vm151, %v133, 0
  %v180 = vsel %vm151, %v134, 0
  %v183 = vsel %vm151, %v135, 0
  %v186 = vsel %vm151, %v136, 0
  %v189 = vsel %vm151, %v137, 0
  %v192 = vsel %vm151, %v138, 0
  %v195 = vsel %vm151, %v139, 0
  %v198 = vsel %vm151, %v140, 0
  %200 = vmatpush.bf16.msra.mxu0 0
  %201 = vmatpush.bf16.msra.mxu0 0
  %202 = vmatpush.bf16.msra.mxu0 0
  %203 = vmatpush.bf16.msra.mxu0 0
  %204 = vmatpush.bf16.msra.mxu0 0
  %205 = vmatpush.bf16.msra.mxu0 0
  %206 = vmatpush.bf16.msra.mxu0 0
  %207 = vmatpush.bf16.msra.mxu0 %v147
  %208 = vmatmul.bf16.gmra.mxu0 %v153
  %v209 = vpop.f32.mrf.mxu0
  %v210 = vadd.f32 %v57, %v209
  %v211 = vpop.f32.mrf.mxu0
  %v212 = vadd.f32 %v57, %v211
  %213 = vmatmul.bf16.gmra.mxu0 %v156
  %v214 = vpop.f32.mrf.mxu0
  %v215 = vadd.f32 %v57, %v214
  %v216 = vpop.f32.mrf.mxu0
  %v217 = vadd.f32 %v57, %v216
  %218 = vmatmul.bf16.gmra.mxu0 %v159
  %v219 = vpop.f32.mrf.mxu0
  %v220 = vadd.f32 %v57, %v219
  %v221 = vpop.f32.mrf.mxu0
  %v222 = vadd.f32 %v57, %v221
  %223 = vmatmul.bf16.gmra.mxu0 %v162
  %v224 = vpop.f32.mrf.mxu0
  %v225 = vadd.f32 %v57, %v224
  %v226 = vpop.f32.mrf.mxu0
  %v227 = vadd.f32 %v57, %v226
  %228 = vmatmul.bf16.gmra.mxu0 %v165
  %v229 = vpop.f32.mrf.mxu0
  %v230 = vadd.f32 %v57, %v229
  %v231 = vpop.f32.mrf.mxu0
  %v232 = vadd.f32 %v57, %v231
  %233 = vmatmul.bf16.gmra.mxu0 %v168
  %v234 = vpop.f32.mrf.mxu0
  %v235 = vadd.f32 %v57, %v234
  %v236 = vpop.f32.mrf.mxu0
  %v237 = vadd.f32 %v57, %v236
  %238 = vmatmul.bf16.gmra.mxu0 %v171
  %v239 = vpop.f32.mrf.mxu0
  %v240 = vadd.f32 %v57, %v239
  %v241 = vpop.f32.mrf.mxu0
  %v242 = vadd.f32 %v57, %v241
  %243 = vmatmul.bf16.gmra.mxu0 %v174
  %v244 = vpop.f32.mrf.mxu0
  %v245 = vadd.f32 %v57, %v244
  %v246 = vpop.f32.mrf.mxu0
  %v247 = vadd.f32 %v57, %v246
  %248 = vmatmul.bf16.gmra.mxu0 %v177
  %v249 = vpop.f32.mrf.mxu0
  %v250 = vadd.f32 %v57, %v249
  %v251 = vpop.f32.mrf.mxu0
  %v252 = vadd.f32 %v57, %v251
  %253 = vmatmul.bf16.gmra.mxu0 %v180
  %v254 = vpop.f32.mrf.mxu0
  %v255 = vadd.f32 %v57, %v254
  %v256 = vpop.f32.mrf.mxu0
  %v257 = vadd.f32 %v57, %v256
  %258 = vmatmul.bf16.gmra.mxu0 %v183
  %v259 = vpop.f32.mrf.mxu0
  %v260 = vadd.f32 %v57, %v259
  %v261 = vpop.f32.mrf.mxu0
  %v262 = vadd.f32 %v57, %v261
  %263 = vmatmul.bf16.gmra.mxu0 %v186
  %v264 = vpop.f32.mrf.mxu0
  %v265 = vadd.f32 %v57, %v264
  %v266 = vpop.f32.mrf.mxu0
  %v267 = vadd.f32 %v57, %v266
  %268 = vmatmul.bf16.gmra.mxu0 %v189
  %v269 = vpop.f32.mrf.mxu0
  %v270 = vadd.f32 %v57, %v269
  %v271 = vpop.f32.mrf.mxu0
  %v272 = vadd.f32 %v57, %v271
  %273 = vmatmul.bf16.gmra.mxu0 %v192
  %v274 = vpop.f32.mrf.mxu0
  %v275 = vadd.f32 %v57, %v274
  %v276 = vpop.f32.mrf.mxu0
  %v277 = vadd.f32 %v57, %v276
  %278 = vmatmul.bf16.gmra.mxu0 %v195
  %v279 = vpop.f32.mrf.mxu0
  %v280 = vadd.f32 %v57, %v279
  %v281 = vpop.f32.mrf.mxu0
  %v282 = vadd.f32 %v57, %v281
  %283 = vmatmul.bf16.gmra.mxu0 %v198
  %v284 = vpop.f32.mrf.mxu0
  %v285 = vadd.f32 %v57, %v284
  %v286 = vpop.f32.mrf.mxu0
  %v287 = vadd.f32 %v57, %v286
  %288 = vdwg.mxu0
  %289 = vmatpush.bf16.msra.mxu0 0
  %290 = vmatpush.bf16.msra.mxu0 0
  %291 = vmatpush.bf16.msra.mxu0 0
  %292 = vmatpush.bf16.msra.mxu0 0
  %293 = vmatpush.bf16.msra.mxu0 0
  %294 = vmatpush.bf16.msra.mxu0 0
  %295 = vmatpush.bf16.msra.mxu0 0
  %296 = vmatpush.bf16.msra.mxu0 %v148
  %297 = vmatmul.bf16.gmra.mxu0 %v153
  %v298 = vpop.f32.mrf.mxu0
  %v299 = vadd.f32 %v58, %v298
  %v300 = vpop.f32.mrf.mxu0
  %v301 = vadd.f32 %v58, %v300
  %302 = vmatmul.bf16.gmra.mxu0 %v156
  %v303 = vpop.f32.mrf.mxu0
  %v304 = vadd.f32 %v58, %v303
  %v305 = vpop.f32.mrf.mxu0
  %v306 = vadd.f32 %v58, %v305
  %307 = vmatmul.bf16.gmra.mxu0 %v159
  %v308 = vpop.f32.mrf.mxu0
  %v309 = vadd.f32 %v58, %v308
  %v310 = vpop.f32.mrf.mxu0
  %v311 = vadd.f32 %v58, %v310
  %312 = vmatmul.bf16.gmra.mxu0 %v162
  %v313 = vpop.f32.mrf.mxu0
  %v314 = vadd.f32 %v58, %v313
  %v315 = vpop.f32.mrf.mxu0
  %v316 = vadd.f32 %v58, %v315
  %317 = vmatmul.bf16.gmra.mxu0 %v165
  %v318 = vpop.f32.mrf.mxu0
  %v319 = vadd.f32 %v58, %v318
  %v320 = vpop.f32.mrf.mxu0
  %v321 = vadd.f32 %v58, %v320
  %322 = vmatmul.bf16.gmra.mxu0 %v168
  %v323 = vpop.f32.mrf.mxu0
  %v324 = vadd.f32 %v58, %v323
  %v325 = vpop.f32.mrf.mxu0
  %v326 = vadd.f32 %v58, %v325
  %327 = vmatmul.bf16.gmra.mxu0 %v171
  %v328 = vpop.f32.mrf.mxu0
  %v329 = vadd.f32 %v58, %v328
  %v330 = vpop.f32.mrf.mxu0
  %v331 = vadd.f32 %v58, %v330
  %332 = vmatmul.bf16.gmra.mxu0 %v174
  %v333 = vpop.f32.mrf.mxu0
  %v334 = vadd.f32 %v58, %v333
  %v335 = vpop.f32.mrf.mxu0
  %v336 = vadd.f32 %v58, %v335
  %337 = vmatmul.bf16.gmra.mxu0 %v177
  %v338 = vpop.f32.mrf.mxu0
  %v339 = vadd.f32 %v58, %v338
  %v340 = vpop.f32.mrf.mxu0
  %v341 = vadd.f32 %v58, %v340
  %342 = vmatmul.bf16.gmra.mxu0 %v180
  %v343 = vpop.f32.mrf.mxu0
  %v344 = vadd.f32 %v58, %v343
  %v345 = vpop.f32.mrf.mxu0
  %v346 = vadd.f32 %v58, %v345
  %347 = vmatmul.bf16.gmra.mxu0 %v183
  %v348 = vpop.f32.mrf.mxu0
  %v349 = vadd.f32 %v58, %v348
  %v350 = vpop.f32.mrf.mxu0
  %v351 = vadd.f32 %v58, %v350
  %352 = vmatmul.bf16.gmra.mxu0 %v186
  %v353 = vpop.f32.mrf.mxu0
  %v354 = vadd.f32 %v58, %v353
  %v355 = vpop.f32.mrf.mxu0
  %v356 = vadd.f32 %v58, %v355
  %357 = vmatmul.bf16.gmra.mxu0 %v189
  %v358 = vpop.f32.mrf.mxu0
  %v359 = vadd.f32 %v58, %v358
  %v360 = vpop.f32.mrf.mxu0
  %v361 = vadd.f32 %v58, %v360
  %362 = vmatmul.bf16.gmra.mxu0 %v192
  %v363 = vpop.f32.mrf.mxu0
  %v364 = vadd.f32 %v58, %v363
  %v365 = vpop.f32.mrf.mxu0
  %v366 = vadd.f32 %v58, %v365
  %367 = vmatmul.bf16.gmra.mxu0 %v195
  %v368 = vpop.f32.mrf.mxu0
  %v369 = vadd.f32 %v58, %v368
  %v370 = vpop.f32.mrf.mxu0
  %v371 = vadd.f32 %v58, %v370
  %372 = vmatmul.bf16.gmra.mxu0 %v198
  %v373 = vpop.f32.mrf.mxu0
  %v374 = vadd.f32 %v58, %v373
  %v375 = vpop.f32.mrf.mxu0
  %v376 = vadd.f32 %v58, %v375
  %377 = vdwg.mxu0
  %v378 = vmax.f32 %v210, 0.0
  %v379 = vmax.f32 %v299, 0.0
  %v380 = vmax.f32 %v212, 0.0
  %v381 = vmax.f32 %v301, 0.0
  %v382 = vmax.f32 %v215, 0.0
  %v383 = vmax.f32 %v304, 0.0
  %v384 = vmax.f32 %v217, 0.0
  %v385 = vmax.f32 %v306, 0.0
  %v386 = vmax.f32 %v220, 0.0
  %v387 = vmax.f32 %v309, 0.0
  %v388 = vmax.f32 %v222, 0.0
  %v389 = vmax.f32 %v311, 0.0
  %v390 = vmax.f32 %v225, 0.0
  %v391 = vmax.f32 %v314, 0.0
  %v392 = vmax.f32 %v227, 0.0
  %v393 = vmax.f32 %v316, 0.0
  %v394 = vmax.f32 %v230, 0.0
  %v395 = vmax.f32 %v319, 0.0
  %v396 = vmax.f32 %v232, 0.0
  %v397 = vmax.f32 %v321, 0.0
  %v398 = vmax.f32 %v235, 0.0
  %v399 = vmax.f32 %v324, 0.0
  %v400 = vmax.f32 %v237, 0.0
  %v401 = vmax.f32 %v326, 0.0
  %v402 = vmax.f32 %v240, 0.0
  %v403 = vmax.f32 %v329, 0.0
  %v404 = vmax.f32 %v242, 0.0
  %v405 = vmax.f32 %v331, 0.0
  %v406 = vmax.f32 %v245, 0.0
  %v407 = vmax.f32 %v334, 0.0
  %v408 = vmax.f32 %v247, 0.0
  %v409 = vmax.f32 %v336, 0.0
  %v410 = vmax.f32 %v250, 0.0
  %v411 = vmax.f32 %v339, 0.0
  %v412 = vmax.f32 %v252, 0.0
  %v413 = vmax.f32 %v341, 0.0
  %v414 = vmax.f32 %v255, 0.0
  %v415 = vmax.f32 %v344, 0.0
  %v416 = vmax.f32 %v257, 0.0
  %v417 = vmax.f32 %v346, 0.0
  %v418 = vmax.f32 %v260, 0.0
  %v419 = vmax.f32 %v349, 0.0
  %v420 = vmax.f32 %v262, 0.0
  %v421 = vmax.f32 %v351, 0.0
  %v422 = vmax.f32 %v265, 0.0
  %v423 = vmax.f32 %v354, 0.0
  %v424 = vmax.f32 %v267, 0.0
  %v425 = vmax.f32 %v356, 0.0
  %v426 = vmax.f32 %v270, 0.0
  %v427 = vmax.f32 %v359, 0.0
  %v428 = vmax.f32 %v272, 0.0
  %v429 = vmax.f32 %v361, 0.0
  %v430 = vmax.f32 %v275, 0.0
  %v431 = vmax.f32 %v364, 0.0
  %v432 = vmax.f32 %v277, 0.0
  %v433 = vmax.f32 %v366, 0.0
  %v434 = vmax.f32 %v280, 0.0
  %v435 = vmax.f32 %v369, 0.0
  %v436 = vmax.f32 %v282, 0.0
  %v437 = vmax.f32 %v371, 0.0
  %v438 = vmax.f32 %v285, 0.0
  %v439 = vmax.f32 %v374, 0.0
  %v440 = vmax.f32 %v287, 0.0
  %v441 = vmax.f32 %v376, 0.0
  %v442 = vpack.c.bf16 %v380, %v378
  %v443 = vpack.c.bf16 %v381, %v379
  %v444 = vpack.c.bf16 %v384, %v382
  %v445 = vpack.c.bf16 %v385, %v383
  %v446 = vpack.c.bf16 %v388, %v386
  %v447 = vpack.c.bf16 %v389, %v387
  %v448 = vpack.c.bf16 %v392, %v390
  %v449 = vpack.c.bf16 %v393, %v391
  %v450 = vpack.c.bf16 %v396, %v394
  %v451 = vpack.c.bf16 %v397, %v395
  %v452 = vpack.c.bf16 %v400, %v398
  %v453 = vpack.c.bf16 %v401, %v399
  %v454 = vpack.c.bf16 %v404, %v402
  %v455 = vpack.c.bf16 %v405, %v403
  %v456 = vpack.c.bf16 %v408, %v406
  %v457 = vpack.c.bf16 %v409, %v407
  %v458 = vpack.c.bf16 %v412, %v410
  %v459 = vpack.c.bf16 %v413, %v411
  %v460 = vpack.c.bf16 %v416, %v414
  %v461 = vpack.c.bf16 %v417, %v415
  %v462 = vpack.c.bf16 %v420, %v418
  %v463 = vpack.c.bf16 %v421, %v419
  %v464 = vpack.c.bf16 %v424, %v422
  %v465 = vpack.c.bf16 %v425, %v423
  %v466 = vpack.c.bf16 %v428, %v426
  %v467 = vpack.c.bf16 %v429, %v427
  %v468 = vpack.c.bf16 %v432, %v430
  %v469 = vpack.c.bf16 %v433, %v431
  %v470 = vpack.c.bf16 %v436, %v434
  %v471 = vpack.c.bf16 %v437, %v435
  %v472 = vpack.c.bf16 %v440, %v438
  %v473 = vpack.c.bf16 %v441, %v439
  %v474 = vld [vmem:[%s3] sm:$0xf]
  %v475 = vld [vmem:[%s3 + $0x4] sm:$0xf]
  %v476 = vld [vmem:[%s3 + $0x8] sm:$0xf]
  %v477 = vld [vmem:[%s3 + $0xc] sm:$0xf]
  %v478 = vld [vmem:[%s3 + $0x10] sm:$0xf]
  %v479 = vld [vmem:[%s3 + $0x14] sm:$0xf]
  %v480 = vld [vmem:[%s3 + $0x18] sm:$0xf]
  %v481 = vld [vmem:[%s3 + $0x1c] sm:$0xf]
  %v482 = vld [vmem:[%s3 + $0x20] sm:$0xf]
  %v483 = vld [vmem:[%s3 + $0x24] sm:$0xf]
  %v484 = vld [vmem:[%s3 + $0x28] sm:$0xf]
  %v485 = vld [vmem:[%s3 + $0x2c] sm:$0xf]
  %v486 = vld [vmem:[%s3 + $0x30] sm:$0xf]
  %v487 = vld [vmem:[%s3 + $0x34] sm:$0xf]
  %v488 = vld [vmem:[%s3 + $0x38] sm:$0xf]
  %v489 = vld [vmem:[%s3 + $0x3c] sm:$0xf]
  %v490 = vld [vmem:[%s3 + $0x40] sm:$0xf]
  %v491 = vld [vmem:[%s3 + $0x44] sm:$0xf]
  %v492 = vld [vmem:[%s3 + $0x48] sm:$0xf]
  %v493 = vld [vmem:[%s3 + $0x4c] sm:$0xf]
  %v494 = vld [vmem:[%s3 + $0x50] sm:$0xf]
  %v495 = vld [vmem:[%s3 + $0x54] sm:$0xf]
  %v496 = vld [vmem:[%s3 + $0x58] sm:$0xf]
  %v497 = vld [vmem:[%s3 + $0x5c] sm:$0xf]
  %v498 = vld [vmem:[%s3 + $0x60] sm:$0xf]
  %v499 = vld [vmem:[%s3 + $0x64] sm:$0xf]
  %v500 = vld [vmem:[%s3 + $0x68] sm:$0xf]
  %v501 = vld [vmem:[%s3 + $0x6c] sm:$0xf]
  %v502 = vld [vmem:[%s3 + $0x70] sm:$0xf]
  %v503 = vld [vmem:[%s3 + $0x74] sm:$0xf]
  %v504 = vld [vmem:[%s3 + $0x78] sm:$0xf]
  %v505 = vld [vmem:[%s3 + $0x7c] sm:$0xf]
  %v506 = vld [vmem:[%s4] sm:$0x1]
  %v508 = vperm.slane %v506, 0
  %v542 = vunpack.c.l.b16 %v474
  %v543 = vunpack.c.l.b16 %v475
  %v544 = vunpack.c.l.b16 %v476
  %v545 = vunpack.c.l.b16 %v477
  %v546 = vunpack.c.l.b16 %v478
  %v547 = vunpack.c.l.b16 %v479
  %v548 = vunpack.c.l.b16 %v480
  %v549 = vunpack.c.l.b16 %v481
  %v550 = vunpack.c.l.b16 %v482
  %v551 = vunpack.c.l.b16 %v483
  %v552 = vunpack.c.l.b16 %v484
  %v553 = vunpack.c.l.b16 %v485
  %v554 = vunpack.c.l.b16 %v486
  %v555 = vunpack.c.l.b16 %v487
  %v556 = vunpack.c.l.b16 %v488
  %v557 = vunpack.c.l.b16 %v489
  %v558 = vunpack.c.l.b16 %v490
  %v559 = vunpack.c.l.b16 %v491
  %v560 = vunpack.c.l.b16 %v492
  %v561 = vunpack.c.l.b16 %v493
  %v562 = vunpack.c.l.b16 %v494
  %v563 = vunpack.c.l.b16 %v495
  %v564 = vunpack.c.l.b16 %v496
  %v565 = vunpack.c.l.b16 %v497
  %v566 = vunpack.c.l.b16 %v498
  %v567 = vunpack.c.l.b16 %v499
  %v568 = vunpack.c.l.b16 %v500
  %v569 = vunpack.c.l.b16 %v501
  %v570 = vunpack.c.l.b16 %v502
  %v571 = vunpack.c.l.b16 %v503
  %v572 = vunpack.c.l.b16 %v504
  %v573 = vunpack.c.l.b16 %v505
  %v574 = vpack.c.b16 %v543, %v542
  %v575 = vpack.c.b16 %v545, %v544
  %v576 = vpack.c.b16 %v547, %v546
  %v577 = vpack.c.b16 %v549, %v548
  %v578 = vpack.c.b16 %v551, %v550
  %v579 = vpack.c.b16 %v553, %v552
  %v580 = vpack.c.b16 %v555, %v554
  %v581 = vpack.c.b16 %v557, %v556
  %v582 = vpack.c.b16 %v559, %v558
  %v583 = vpack.c.b16 %v561, %v560
  %v584 = vpack.c.b16 %v563, %v562
  %v585 = vpack.c.b16 %v565, %v564
  %v586 = vpack.c.b16 %v567, %v566
  %v587 = vpack.c.b16 %v569, %v568
  %v588 = vpack.c.b16 %v571, %v570
  %v589 = vpack.c.b16 %v573, %v572
  %606 = vmatpush.bf16.msra.mxu0 %v581
  %607 = vmatpush.bf16.msra.mxu0 %v580
  %608 = vmatpush.bf16.msra.mxu0 %v579
  %609 = vmatpush.bf16.msra.mxu0 %v578
  %610 = vmatpush.bf16.msra.mxu0 %v577
  %611 = vmatpush.bf16.msra.mxu0 %v576
  %612 = vmatpush.bf16.msra.mxu0 %v575
  %613 = vmatpush.bf16.msra.mxu0 %v574
  %614 = vmatmul.bf16.gmra.mxu0 %v442
  %v615 = vpop.f32.mrf.mxu0
  %v616 = vadd.f32 %v508, %v615
  %v617 = vpop.f32.mrf.mxu0
  %v618 = vadd.f32 %v508, %v617
  %619 = vmatmul.bf16.gmra.mxu0 %v444
  %v620 = vpop.f32.mrf.mxu0
  %v621 = vadd.f32 %v508, %v620
  %v622 = vpop.f32.mrf.mxu0
  %v623 = vadd.f32 %v508, %v622
  %624 = vmatmul.bf16.gmra.mxu0 %v446
  %v625 = vpop.f32.mrf.mxu0
  %v626 = vadd.f32 %v508, %v625
  %v627 = vpop.f32.mrf.mxu0
  %v628 = vadd.f32 %v508, %v627
  %629 = vmatmul.bf16.gmra.mxu0 %v448
  %v630 = vpop.f32.mrf.mxu0
  %v631 = vadd.f32 %v508, %v630
  %v632 = vpop.f32.mrf.mxu0
  %v633 = vadd.f32 %v508, %v632
  %634 = vmatmul.bf16.gmra.mxu0 %v450
  %v635 = vpop.f32.mrf.mxu0
  %v636 = vadd.f32 %v508, %v635
  %v637 = vpop.f32.mrf.mxu0
  %v638 = vadd.f32 %v508, %v637
  %639 = vmatmul.bf16.gmra.mxu0 %v452
  %v640 = vpop.f32.mrf.mxu0
  %v641 = vadd.f32 %v508, %v640
  %v642 = vpop.f32.mrf.mxu0
  %v643 = vadd.f32 %v508, %v642
  %644 = vmatmul.bf16.gmra.mxu0 %v454
  %v645 = vpop.f32.mrf.mxu0
  %v646 = vadd.f32 %v508, %v645
  %v647 = vpop.f32.mrf.mxu0
  %v648 = vadd.f32 %v508, %v647
  %649 = vmatmul.bf16.gmra.mxu0 %v456
  %v650 = vpop.f32.mrf.mxu0
  %v651 = vadd.f32 %v508, %v650
  %v652 = vpop.f32.mrf.mxu0
  %v653 = vadd.f32 %v508, %v652
  %654 = vmatmul.bf16.gmra.mxu0 %v458
  %v655 = vpop.f32.mrf.mxu0
  %v656 = vadd.f32 %v508, %v655
  %v657 = vpop.f32.mrf.mxu0
  %v658 = vadd.f32 %v508, %v657
  %659 = vmatmul.bf16.gmra.mxu0 %v460
  %v660 = vpop.f32.mrf.mxu0
  %v661 = vadd.f32 %v508, %v660
  %v662 = vpop.f32.mrf.mxu0
  %v663 = vadd.f32 %v508, %v662
  %664 = vmatmul.bf16.gmra.mxu0 %v462
  %v665 = vpop.f32.mrf.mxu0
  %v666 = vadd.f32 %v508, %v665
  %v667 = vpop.f32.mrf.mxu0
  %v668 = vadd.f32 %v508, %v667
  %669 = vmatmul.bf16.gmra.mxu0 %v464
  %v670 = vpop.f32.mrf.mxu0
  %v671 = vadd.f32 %v508, %v670
  %v672 = vpop.f32.mrf.mxu0
  %v673 = vadd.f32 %v508, %v672
  %674 = vmatmul.bf16.gmra.mxu0 %v466
  %v675 = vpop.f32.mrf.mxu0
  %v676 = vadd.f32 %v508, %v675
  %v677 = vpop.f32.mrf.mxu0
  %v678 = vadd.f32 %v508, %v677
  %679 = vmatmul.bf16.gmra.mxu0 %v468
  %v680 = vpop.f32.mrf.mxu0
  %v681 = vadd.f32 %v508, %v680
  %v682 = vpop.f32.mrf.mxu0
  %v683 = vadd.f32 %v508, %v682
  %684 = vmatmul.bf16.gmra.mxu0 %v470
  %v685 = vpop.f32.mrf.mxu0
  %v686 = vadd.f32 %v508, %v685
  %v687 = vpop.f32.mrf.mxu0
  %v688 = vadd.f32 %v508, %v687
  %689 = vmatmul.bf16.gmra.mxu0 %v472
  %v690 = vpop.f32.mrf.mxu0
  %v691 = vadd.f32 %v508, %v690
  %v692 = vpop.f32.mrf.mxu0
  %v693 = vadd.f32 %v508, %v692
  %694 = vdwg.mxu0
  %695 = vmatpush.bf16.msra.mxu0 %v589
  %696 = vmatpush.bf16.msra.mxu0 %v588
  %697 = vmatpush.bf16.msra.mxu0 %v587
  %698 = vmatpush.bf16.msra.mxu0 %v586
  %699 = vmatpush.bf16.msra.mxu0 %v585
  %700 = vmatpush.bf16.msra.mxu0 %v584
  %701 = vmatpush.bf16.msra.mxu0 %v583
  %702 = vmatpush.bf16.msra.mxu0 %v582
  %703 = vmatmul.bf16.gmra.mxu0 %v443
  %v704 = vpop.f32.mrf.mxu0
  %v705 = vadd.f32 %v616, %v704
  %v706 = vpop.f32.mrf.mxu0
  %v707 = vadd.f32 %v618, %v706
  %708 = vmatmul.bf16.gmra.mxu0 %v445
  %v709 = vpop.f32.mrf.mxu0
  %v710 = vadd.f32 %v621, %v709
  %v711 = vpop.f32.mrf.mxu0
  %v712 = vadd.f32 %v623, %v711
  %713 = vmatmul.bf16.gmra.mxu0 %v447
  %v714 = vpop.f32.mrf.mxu0
  %v715 = vadd.f32 %v626, %v714
  %v716 = vpop.f32.mrf.mxu0
  %v717 = vadd.f32 %v628, %v716
  %718 = vmatmul.bf16.gmra.mxu0 %v449
  %v719 = vpop.f32.mrf.mxu0
  %v720 = vadd.f32 %v631, %v719
  %v721 = vpop.f32.mrf.mxu0
  %v722 = vadd.f32 %v633, %v721
  %723 = vmatmul.bf16.gmra.mxu0 %v451
  %v724 = vpop.f32.mrf.mxu0
  %v725 = vadd.f32 %v636, %v724
  %v726 = vpop.f32.mrf.mxu0
  %v727 = vadd.f32 %v638, %v726
  %728 = vmatmul.bf16.gmra.mxu0 %v453
  %v729 = vpop.f32.mrf.mxu0
  %v730 = vadd.f32 %v641, %v729
  %v731 = vpop.f32.mrf.mxu0
  %v732 = vadd.f32 %v643, %v731
  %733 = vmatmul.bf16.gmra.mxu0 %v455
  %v734 = vpop.f32.mrf.mxu0
  %v735 = vadd.f32 %v646, %v734
  %v736 = vpop.f32.mrf.mxu0
  %v737 = vadd.f32 %v648, %v736
  %738 = vmatmul.bf16.gmra.mxu0 %v457
  %v739 = vpop.f32.mrf.mxu0
  %v740 = vadd.f32 %v651, %v739
  %v741 = vpop.f32.mrf.mxu0
  %v742 = vadd.f32 %v653, %v741
  %743 = vmatmul.bf16.gmra.mxu0 %v459
  %v744 = vpop.f32.mrf.mxu0
  %v745 = vadd.f32 %v656, %v744
  %v746 = vpop.f32.mrf.mxu0
  %v747 = vadd.f32 %v658, %v746
  %748 = vmatmul.bf16.gmra.mxu0 %v461
  %v749 = vpop.f32.mrf.mxu0
  %v750 = vadd.f32 %v661, %v749
  %v751 = vpop.f32.mrf.mxu0
  %v752 = vadd.f32 %v663, %v751
  %753 = vmatmul.bf16.gmra.mxu0 %v463
  %v754 = vpop.f32.mrf.mxu0
  %v755 = vadd.f32 %v666, %v754
  %v756 = vpop.f32.mrf.mxu0
  %v757 = vadd.f32 %v668, %v756
  %758 = vmatmul.bf16.gmra.mxu0 %v465
  %v759 = vpop.f32.mrf.mxu0
  %v760 = vadd.f32 %v671, %v759
  %v761 = vpop.f32.mrf.mxu0
  %v762 = vadd.f32 %v673, %v761
  %763 = vmatmul.bf16.gmra.mxu0 %v467
  %v764 = vpop.f32.mrf.mxu0
  %v765 = vadd.f32 %v676, %v764
  %v766 = vpop.f32.mrf.mxu0
  %v767 = vadd.f32 %v678, %v766
  %768 = vmatmul.bf16.gmra.mxu0 %v469
  %v769 = vpop.f32.mrf.mxu0
  %v770 = vadd.f32 %v681, %v769
  %v771 = vpop.f32.mrf.mxu0
  %v772 = vadd.f32 %v683, %v771
  %773 = vmatmul.bf16.gmra.mxu0 %v471
  %v774 = vpop.f32.mrf.mxu0
  %v775 = vadd.f32 %v686, %v774
  %v776 = vpop.f32.mrf.mxu0
  %v777 = vadd.f32 %v688, %v776
  %778 = vmatmul.bf16.gmra.mxu0 %v473
  %v779 = vpop.f32.mrf.mxu0
  %v780 = vadd.f32 %v691, %v779
  %v781 = vpop.f32.mrf.mxu0
  %v782 = vadd.f32 %v693, %v781
  %783 = vdwg.mxu0
  %vm784 = vcmask 64512
  %785 = vst.msk [vmem:[%s5] sm:$0xff] %vm784, %v705
  %786 = vst.msk [vmem:[%s5 + $0x8] sm:$0xff] %vm784, %v707
  %787 = vst.msk [vmem:[%s5 + $0x10] sm:$0xff] %vm784, %v710
  %788 = vst.msk [vmem:[%s5 + $0x18] sm:$0xff] %vm784, %v712
  %789 = vst.msk [vmem:[%s5 + $0x20] sm:$0xff] %vm784, %v715
  %790 = vst.msk [vmem:[%s5 + $0x28] sm:$0xff] %vm784, %v717
  %791 = vst.msk [vmem:[%s5 + $0x30] sm:$0xff] %vm784, %v720
  %792 = vst.msk [vmem:[%s5 + $0x38] sm:$0xff] %vm784, %v722
  %793 = vst.msk [vmem:[%s5 + $0x40] sm:$0xff] %vm784, %v725
  %794 = vst.msk [vmem:[%s5 + $0x48] sm:$0xff] %vm784, %v727
  %795 = vst.msk [vmem:[%s5 + $0x50] sm:$0xff] %vm784, %v730
  %796 = vst.msk [vmem:[%s5 + $0x58] sm:$0xff] %vm784, %v732
  %797 = vst.msk [vmem:[%s5 + $0x60] sm:$0xff] %vm784, %v735
  %798 = vst.msk [vmem:[%s5 + $0x68] sm:$0xff] %vm784, %v737
  %799 = vst.msk [vmem:[%s5 + $0x70] sm:$0xff] %vm784, %v740
  %800 = vst.msk [vmem:[%s5 + $0x78] sm:$0xff] %vm784, %v742
  %801 = vst.msk [vmem:[%s5 + $0x80] sm:$0xff] %vm784, %v745
  %802 = vst.msk [vmem:[%s5 + $0x88] sm:$0xff] %vm784, %v747
  %803 = vst.msk [vmem:[%s5 + $0x90] sm:$0xff] %vm784, %v750
  %804 = vst.msk [vmem:[%s5 + $0x98] sm:$0xff] %vm784, %v752
  %805 = vst.msk [vmem:[%s5 + $0xa0] sm:$0xff] %vm784, %v755
  %806 = vst.msk [vmem:[%s5 + $0xa8] sm:$0xff] %vm784, %v757
  %807 = vst.msk [vmem:[%s5 + $0xb0] sm:$0xff] %vm784, %v760
  %808 = vst.msk [vmem:[%s5 + $0xb8] sm:$0xff] %vm784, %v762
  %809 = vst.msk [vmem:[%s5 + $0xc0] sm:$0xff] %vm784, %v765
  %810 = vst.msk [vmem:[%s5 + $0xc8] sm:$0xff] %vm784, %v767
  %811 = vst.msk [vmem:[%s5 + $0xd0] sm:$0xff] %vm784, %v770
  %812 = vst.msk [vmem:[%s5 + $0xd8] sm:$0xff] %vm784, %v772
  %813 = vst.msk [vmem:[%s5 + $0xe0] sm:$0xff] %vm784, %v775
  %814 = vst.msk [vmem:[%s5 + $0xe8] sm:$0xff] %vm784, %v777
  %815 = vst.msk [vmem:[%s5 + $0xf0] sm:$0xff] %vm784, %v780
  %816 = vst.msk [vmem:[%s5 + $0xf8] sm:$0xff] %vm784, %v782
  // Predicated region
  $region22: #{_dqn_forward_impl.1} parent=0 // pred_check
    _
  $region23: #{_dqn_forward_impl.1} parent=0 // pred_check_branch
    %818 = sbr.rel (0) target = $region25
  $region24: #{_dqn_forward_impl.1} parent=0 // pred_region
    _
  $region25: #{_dqn_forward_impl.1} parent=0 // pred_fallthru
    _
  // Predicated region
  $region26: #{_dqn_forward_impl.1} parent=0 // pred_check
    _
  $region27: #{_dqn_forward_impl.1} parent=0 // pred_check_branch
    %820 = sbr.rel (0) target = $region29
  $region28: #{_dqn_forward_impl.1} parent=0 // pred_region
    _
  $region29: #{_dqn_forward_impl.1} parent=0 // pred_fallthru
    _

</llo_original>
